<compile_context>
chip_gen: v7x
topology: tpu7x:2x2x1
jax: 0.10.0
libtpu: 0.0.40
codegen_flags: <defaults>
</compile_context>

<pallas_src>
import jax
import jax.numpy as jnp
from jax.experimental import pallas as pl
from jax.experimental.pallas import tpu as pltpu


def _round_up(v, m):
    return ((v + m - 1) // m) * m


def mlp_kernel(x_ref, w1_ref, b1_ref, w2_ref, b2_ref, o_ref):
    # fc1 + ReLU: (TB, 4) @ (4, 10) + (1, 10), f32 accumulation on the MXU.
    h = jnp.dot(x_ref[...], w1_ref[...], preferred_element_type=jnp.float32)
    h = jnp.maximum(h + b1_ref[...], 0.0)
    # fc2: (TB, 10) @ (10, 3) + (1, 3)  -- true 3-wide output (no lane padding).
    y = jnp.dot(h, w2_ref[...], preferred_element_type=jnp.float32)
    o_ref[...] = (y + b2_ref[...]).astype(o_ref.dtype)


def simple_nn_forward(x, w1, b1, w2, b2, *, tb=4096):
    """x: (B, 4) f32, w1: (4, 10), b1: (1, 10), w2: (10, 3), b2: (1, 3) -> (B, 3) f32."""
    B, in_f = x.shape
    hid = w1.shape[1]
    n_out = w2.shape[1]

    # Batch tile: big enough to amortize per-step pipeline overhead, small enough
    # that the grid has >=4 steps when B allows (keeps both v7x TCs busy via the
    # "parallel" semantics). Multiple of 8 (f32 sublane granularity).
    TB = max(8, min(int(tb), _round_up(pl.cdiv(B, 4), 8)))
    grid = (pl.cdiv(B, TB),)  # partial last block is masked by Pallas

    # Right-size the scoped-VMEM request from the actual (lane-padded,
    # double-buffered) block footprints, with 2x headroom, capped at 32 MiB.
    def lane_pad_bytes(rows, cols):
        return rows * _round_up(cols, 128) * 4

    vmem_est = (
        2 * lane_pad_bytes(TB, in_f)        # x blocks (double-buffered)
        + 2 * lane_pad_bytes(TB, n_out)     # out blocks (double-buffered)
        + 2 * (lane_pad_bytes(in_f, hid) + lane_pad_bytes(1, hid)
               + lane_pad_bytes(hid, n_out) + lane_pad_bytes(1, n_out))
    )
    vmem_limit = int(min(max(2 * vmem_est, 4 * 1024 * 1024), 32 * 1024 * 1024))

    return pl.pallas_call(
        mlp_kernel,
        out_shape=jax.ShapeDtypeStruct((B, n_out), jnp.float32),
        grid=grid,
        in_specs=[
            pl.BlockSpec((TB, in_f), lambda i: (i, 0)),     # x: tiled over batch
            pl.BlockSpec((in_f, hid), lambda i: (0, 0)),    # w1: VMEM-resident
            pl.BlockSpec((1, hid), lambda i: (0, 0)),       # b1: VMEM-resident
            pl.BlockSpec((hid, n_out), lambda i: (0, 0)),   # w2: VMEM-resident
            pl.BlockSpec((1, n_out), lambda i: (0, 0)),     # b2: VMEM-resident
        ],
        out_specs=pl.BlockSpec((TB, n_out), lambda i: (i, 0)),
        compiler_params=pltpu.CompilerParams(
            dimension_semantics=("parallel",),  # shards batch tiles across TCs on v7x
            vmem_limit_bytes=vmem_limit,
        ),
    )(x, w1, b1, w2, b2)


def init_params(key):
    """Deterministic init mimicking nn.Linear's uniform(-1/sqrt(fan_in), 1/sqrt(fan_in))."""
    k1, k2, k3, k4 = jax.random.split(key, 4)
    bound1 = 1.0 / jnp.sqrt(4.0)
    bound2 = 1.0 / jnp.sqrt(10.0)
    w1 = jax.random.uniform(k1, (4, 10), jnp.float32, -bound1, bound1)   # (in, out)
    b1 = jax.random.uniform(k2, (1, 10), jnp.float32, -bound1, bound1)
    w2 = jax.random.uniform(k3, (10, 3), jnp.float32, -bound2, bound2)
    b2 = jax.random.uniform(k4, (1, 3), jnp.float32, -bound2, bound2)
    return w1, b1, w2, b2


if __name__ == "__main__":
    key = jax.random.PRNGKey(0)
    kx, kp = jax.random.split(key)

    # Small, non-multiple-of-8 batch: with the TB heuristic this gives a
    # multi-step grid (TB=16, 3 steps) plus a masked partial last block.
    batch = 37
    x = jax.random.normal(kx, (batch, 4), jnp.float32)
    w1, b1, w2, b2 = init_params(kp)

    out = simple_nn_forward(x, w1, b1, w2, b2)
    out = jax.block_until_ready(out)

    # Reference check in plain JAX
    ref = jnp.maximum(x @ w1 + b1, 0.0) @ w2 + b2
    assert out.shape == (batch, 3)
    assert jnp.allclose(out, ref, atol=1e-5, rtol=1e-5)

    print("KERNEL_OK")
</pallas_src>

<mosaic_0001>
module attributes {stable_mosaic.version = 11 : i64} {
  func.func @mlp_kernel(%arg0: i32, %arg1: memref<16x4xf32, #tpu.memory_space<vmem>>, %arg2: memref<4x10xf32, #tpu.memory_space<vmem>>, %arg3: memref<1x10xf32, #tpu.memory_space<vmem>>, %arg4: memref<10x3xf32, #tpu.memory_space<vmem>>, %arg5: memref<1x3xf32, #tpu.memory_space<vmem>>, %arg6: memref<16x3xf32, #tpu.memory_space<vmem>>) attributes {dimension_semantics = [#tpu.dimension_semantics<parallel>], iteration_bounds = array<i64: 3>, scalar_prefetch = 0 : i64, scratch_operands = 0 : i64, tpu.core_type = #tpu.core_type<tc>, window_params = [{transform_indices = @transform_0, window_bounds = array<i64: 16, 4>}, {pipeline_mode = #tpu.pipeline_mode<synchronous>, transform_indices = @transform_1, window_bounds = array<i64: 4, 10>}, {pipeline_mode = #tpu.pipeline_mode<synchronous>, transform_indices = @transform_2, window_bounds = array<i64: 1, 10>}, {pipeline_mode = #tpu.pipeline_mode<synchronous>, transform_indices = @transform_3, window_bounds = array<i64: 10, 3>}, {pipeline_mode = #tpu.pipeline_mode<synchronous>, transform_indices = @transform_4, window_bounds = array<i64: 1, 3>}, {transform_indices = @transform_5, window_bounds = array<i64: 16, 3>}]} {
    %c0 = arith.constant 0 : index
    %c0_0 = arith.constant 0 : index
    %0 = vector.load %arg1[%c0, %c0_0] : memref<16x4xf32, #tpu.memory_space<vmem>>, vector<16x4xf32>
    %c0_1 = arith.constant 0 : index
    %c0_2 = arith.constant 0 : index
    %1 = vector.load %arg2[%c0_1, %c0_2] : memref<4x10xf32, #tpu.memory_space<vmem>>, vector<4x10xf32>
    %cst = arith.constant dense<0.000000e+00> : vector<16x10xf32>
    %2 = tpu.matmul %0, %1, %cst {dimension_numbers = #tpu.dot_dimension_numbers<[1], [0], [0], [1], [0, 0, 1, 1], [], []>} : vector<16x4xf32>, vector<4x10xf32>, vector<16x10xf32> -> vector<16x10xf32>
    %c0_3 = arith.constant 0 : index
    %c0_4 = arith.constant 0 : index
    %3 = vector.load %arg3[%c0_3, %c0_4] : memref<1x10xf32, #tpu.memory_space<vmem>>, vector<1x10xf32>
    %4 = vector.broadcast %3 : vector<1x10xf32> to vector<16x10xf32>
    %5 = arith.addf %2, %4 : vector<16x10xf32>
    %cst_5 = arith.constant 0.000000e+00 : f32
    %6 = vector.broadcast %cst_5 : f32 to vector<16x10xf32>
    %7 = arith.maximumf %5, %6 : vector<16x10xf32>
    %c0_6 = arith.constant 0 : index
    %c0_7 = arith.constant 0 : index
    %8 = vector.load %arg4[%c0_6, %c0_7] : memref<10x3xf32, #tpu.memory_space<vmem>>, vector<10x3xf32>
    %cst_8 = arith.constant dense<0.000000e+00> : vector<16x3xf32>
    %9 = tpu.matmul %7, %8, %cst_8 {dimension_numbers = #tpu.dot_dimension_numbers<[1], [0], [0], [1], [0, 0, 1, 1], [], []>} : vector<16x10xf32>, vector<10x3xf32>, vector<16x3xf32> -> vector<16x3xf32>
    %c0_9 = arith.constant 0 : index
    %c0_10 = arith.constant 0 : index
    %10 = vector.load %arg5[%c0_9, %c0_10] : memref<1x3xf32, #tpu.memory_space<vmem>>, vector<1x3xf32>
    %11 = vector.broadcast %10 : vector<1x3xf32> to vector<16x3xf32>
    %12 = arith.addf %9, %11 : vector<16x3xf32>
    %c0_11 = arith.constant 0 : index
    %c0_12 = arith.constant 0 : index
    %13 = vector.load %arg6[%c0_11, %c0_12] : memref<16x3xf32, #tpu.memory_space<vmem>>, vector<16x3xf32>
    tpu.vector_store %arg6[%c0_11, %c0_12], %12 {strides = array<i32>} : memref<16x3xf32, #tpu.memory_space<vmem>>, vector<16x3xf32>,
    return
  }
  func.func @transform_0(%arg0: i32) -> (i32, i32) {
    %c0_i32 = arith.constant 0 : i32
    %c0_i32_0 = arith.constant 0 : i32
    return %arg0, %c0_i32 : i32, i32
  }
  func.func @transform_1(%arg0: i32) -> (i32, i32) {
    %c0_i32 = arith.constant 0 : i32
    %c0_i32_0 = arith.constant 0 : i32
    %c0_i32_1 = arith.constant 0 : i32
    return %c0_i32, %c0_i32_0 : i32, i32
  }
  func.func @transform_2(%arg0: i32) -> (i32, i32) {
    %c0_i32 = arith.constant 0 : i32
    %c0_i32_0 = arith.constant 0 : i32
    %c0_i32_1 = arith.constant 0 : i32
    return %c0_i32, %c0_i32_0 : i32, i32
  }
  func.func @transform_3(%arg0: i32) -> (i32, i32) {
    %c0_i32 = arith.constant 0 : i32
    %c0_i32_0 = arith.constant 0 : i32
    %c0_i32_1 = arith.constant 0 : i32
    return %c0_i32, %c0_i32_0 : i32, i32
  }
  func.func @transform_4(%arg0: i32) -> (i32, i32) {
    %c0_i32 = arith.constant 0 : i32
    %c0_i32_0 = arith.constant 0 : i32
    %c0_i32_1 = arith.constant 0 : i32
    return %c0_i32, %c0_i32_0 : i32, i32
  }
  func.func @transform_5(%arg0: i32) -> (i32, i32) {
    %c0_i32 = arith.constant 0 : i32
    %c0_i32_0 = arith.constant 0 : i32
    return %arg0, %c0_i32 : i32, i32
  }
}

</mosaic_0001>

<llo_original>
// kernel: tpu_custom_call.1
$region0: #{tpu_custom_call.1}
  #allocation0 [shape = 'u32[]', space=smem, size = 0x4, offset = 0x4, fixed_abs, tag = 'smem constant byte address 0x4 - core index']
  #allocation1 [shape = 'u32[144,128]{1,0:T(1,128)}', space=vmem, size = 0x12000, scoped, tag = 'internal scratch']
  %s0 = inlined_call_operand.vmem [shape: f32[37,4], index: 0, kind: input, shape index: {}]
  %s1 = inlined_call_operand.vmem [shape: f32[4,10], index: 1, kind: input, shape index: {}]
  %s2 = inlined_call_operand.vmem [shape: f32[1,10], index: 2, kind: input, shape index: {}]
  %s3 = inlined_call_operand.vmem [shape: f32[10,3], index: 3, kind: input, shape index: {}]
  %s4 = inlined_call_operand.vmem [shape: f32[1,3], index: 4, kind: input, shape index: {}]
  %s5 = inlined_call_operand.vmem [shape: f32[37,3], index: 5, kind: output, shape index: {}]
  %s6 = sld [smem:[#allocation0]]
  $region101: #{tpu_custom_call.1} parent=0
    _
  %s8 = ssub.s32 1, %s6
  %s9 = scalar_select 0, %s8, %s6
  $region1: #{tpu_custom_call.1} parent=0
    #allocation2 [shape = 'u8[16384]{0}', space=vmem, size = 0x4000, scoped, tag = 'output window, operand 0']
    loop: start=0, step=1, limit=5
    $region2: #{tpu_custom_call.1} parent=1 // loop_pre_header
      _
    $region3: #{tpu_custom_call.1} parent=1 // loop_header
      %s11 = sphi 0, %s15
      %p12 = scmp.ge.s32.totalorder %s11, 5
      %s21 = sphi 0, %s23
      %s24 = sphi 0, %s21
      %s25 = sphi 0, %s24
      %s41 = sphi 0, %s25
      %s45 = sphi 0, %s45
      %s47 = sphi 0, %s45
      %s48 = sphi 0, %s47
      %s62 = sphi 0, %s48
      %s66 = sphi 0, %s66
      %s68 = sphi 0, %s66
      %s69 = sphi 0, %s68
      %s83 = sphi 0, %s69
      %s87 = sphi 0, %s87
      %s89 = sphi 0, %s87
      %s90 = sphi 0, %s89
      %s104 = sphi 0, %s90
      %s108 = sphi 0, %s108
      %s110 = sphi 0, %s108
      %s111 = sphi 0, %s110
      %s125 = sphi 0, %s111
      %s131 = sphi 0, %s133
      %s134 = sphi 0, %s131
      %s135 = sphi 0, %s134
      %s151 = sphi 0, %s135
    $region4: #{tpu_custom_call.1} parent=1 // loop_header_branch
      %14 = sbr.rel (%p12) target = $region8
    $region5: #{tpu_custom_call.1} parent=1 // loop_body
      %s16 = ssub.s32 %s11, 1
      %s17 = ssub.s32 %s11, 2
      %s18 = sadd.s32 %s11, 1
      %s19 = ssub.s32 %s11, %s18
      %p20 = scmp.eq.s32.totalorder %s19, 0
      %s22 = sadd.s32 %s21, 1
      %s23 = scalar_select %p20, %s21, %s22
      %p26 = pneg %p20
      %p27 = scmp.eq.s32.totalorder %s11, 2
      %p28 = por %p26, %p27
      %p29 = scmp.ne.s32.totalorder %s21, %s24
      %p30 = scmp.eq.s32.totalorder %s11, 0
      %p31 = por %p29, %p30
      %p32 = scmp.ne.s32.totalorder %s21, %s24
      %p33 = scmp.eq.s32.totalorder %s16, 2
      %p34 = por %p32, %p33
      %p35 = scmp.ne.s32.totalorder %s24, %s25
      %p36 = scmp.eq.s32.totalorder %s16, 0
      %p37 = por %p35, %p36
      %p38 = scmp.ne.s32.totalorder %s24, %s25
      %p39 = scmp.eq.s32.totalorder %s17, 2
      %p40 = por %p38, %p39
      %p42 = scmp.ne.s32.totalorder %s25, %s41
      %p43 = scmp.eq.s32.totalorder %s17, 0
      %p44 = por %p42, %p43
      %s46 = sadd.s32 %s45, 1
      %p49 = scmp.eq.s32.totalorder %s11, 2
      %p50 = scmp.ne.s32.totalorder %s45, %s47
      %p51 = scmp.eq.s32.totalorder %s11, 0
      %p52 = por %p50, %p51
      %p53 = scmp.ne.s32.totalorder %s45, %s47
      %p54 = scmp.eq.s32.totalorder %s16, 2
      %p55 = por %p53, %p54
      %p56 = scmp.ne.s32.totalorder %s47, %s48
      %p57 = scmp.eq.s32.totalorder %s16, 0
      %p58 = por %p56, %p57
      %p59 = scmp.ne.s32.totalorder %s47, %s48
      %p60 = scmp.eq.s32.totalorder %s17, 2
      %p61 = por %p59, %p60
      %p63 = scmp.ne.s32.totalorder %s48, %s62
      %p64 = scmp.eq.s32.totalorder %s17, 0
      %p65 = por %p63, %p64
      %s67 = sadd.s32 %s66, 1
      %p70 = scmp.eq.s32.totalorder %s11, 2
      %p71 = scmp.ne.s32.totalorder %s66, %s68
      %p72 = scmp.eq.s32.totalorder %s11, 0
      %p73 = por %p71, %p72
      %p74 = scmp.ne.s32.totalorder %s66, %s68
      %p75 = scmp.eq.s32.totalorder %s16, 2
      %p76 = por %p74, %p75
      %p77 = scmp.ne.s32.totalorder %s68, %s69
      %p78 = scmp.eq.s32.totalorder %s16, 0
      %p79 = por %p77, %p78
      %p80 = scmp.ne.s32.totalorder %s68, %s69
      %p81 = scmp.eq.s32.totalorder %s17, 2
      %p82 = por %p80, %p81
      %p84 = scmp.ne.s32.totalorder %s69, %s83
      %p85 = scmp.eq.s32.totalorder %s17, 0
      %p86 = por %p84, %p85
      %s88 = sadd.s32 %s87, 1
      %p91 = scmp.eq.s32.totalorder %s11, 2
      %p92 = scmp.ne.s32.totalorder %s87, %s89
      %p93 = scmp.eq.s32.totalorder %s11, 0
      %p94 = por %p92, %p93
      %p95 = scmp.ne.s32.totalorder %s87, %s89
      %p96 = scmp.eq.s32.totalorder %s16, 2
      %p97 = por %p95, %p96
      %p98 = scmp.ne.s32.totalorder %s89, %s90
      %p99 = scmp.eq.s32.totalorder %s16, 0
      %p100 = por %p98, %p99
      %p101 = scmp.ne.s32.totalorder %s89, %s90
      %p102 = scmp.eq.s32.totalorder %s17, 2
      %p103 = por %p101, %p102
      %p105 = scmp.ne.s32.totalorder %s90, %s104
      %p106 = scmp.eq.s32.totalorder %s17, 0
      %p107 = por %p105, %p106
      %s109 = sadd.s32 %s108, 1
      %p112 = scmp.eq.s32.totalorder %s11, 2
      %p113 = scmp.ne.s32.totalorder %s108, %s110
      %p114 = scmp.eq.s32.totalorder %s11, 0
      %p115 = por %p113, %p114
      %p116 = scmp.ne.s32.totalorder %s108, %s110
      %p117 = scmp.eq.s32.totalorder %s16, 2
      %p118 = por %p116, %p117
      %p119 = scmp.ne.s32.totalorder %s110, %s111
      %p120 = scmp.eq.s32.totalorder %s16, 0
      %p121 = por %p119, %p120
      %p122 = scmp.ne.s32.totalorder %s110, %s111
      %p123 = scmp.eq.s32.totalorder %s17, 2
      %p124 = por %p122, %p123
      %p126 = scmp.ne.s32.totalorder %s111, %s125
      %p127 = scmp.eq.s32.totalorder %s17, 0
      %p128 = por %p126, %p127
      %s129 = ssub.s32 %s11, %s18
      %p130 = scmp.eq.s32.totalorder %s129, 0
      %s132 = sadd.s32 %s131, 1
      %s133 = scalar_select %p130, %s131, %s132
      %p136 = pneg %p130
      %p137 = scmp.eq.s32.totalorder %s11, 2
      %p138 = por %p136, %p137
      %p139 = scmp.ne.s32.totalorder %s131, %s134
      %p140 = scmp.eq.s32.totalorder %s11, 0
      %p141 = por %p139, %p140
      %p142 = scmp.ne.s32.totalorder %s131, %s134
      %p143 = scmp.eq.s32.totalorder %s16, 2
      %p144 = por %p142, %p143
      %p145 = scmp.ne.s32.totalorder %s134, %s135
      %p146 = scmp.eq.s32.totalorder %s16, 0
      %p147 = por %p145, %p146
      %p148 = scmp.ne.s32.totalorder %s134, %s135
      %p149 = scmp.eq.s32.totalorder %s17, 2
      %p150 = por %p148, %p149
      %p152 = scmp.ne.s32.totalorder %s135, %s151
      %p153 = scmp.eq.s32.totalorder %s17, 0
      %p154 = por %p152, %p153
      %p155 = scmp.le.s32.totalorder 1, %s11
      %p156 = scmp.lt.s32.totalorder %s11, 4
      %p157 = pnand %p155, %p156
      %p158 = pneg %p157
      // Predicated region
      $region9: #{tpu_custom_call.1} parent=5 // pred_check
        _
      $region10: #{tpu_custom_call.1} parent=5 // pred_check_branch
        %160 = sbr.rel (%p157) target = $region12
      $region11: #{tpu_custom_call.1} parent=5 // pred_region
        %s161 = ssub.s32 %s11, 1
        // Predicated region
        $region13: #{tpu_custom_call.1} parent=11 // pred_check
          %p162 = pneg %p58
        $region14: #{tpu_custom_call.1} parent=11 // pred_check_branch
          %164 = sbr.rel (%p162) target = $region16
        $region15: #{tpu_custom_call.1} parent=11 // pred_region
          _
        $region16: #{tpu_custom_call.1} parent=11 // pred_fallthru
          _
        // Predicated region
        $region17: #{tpu_custom_call.1} parent=11 // pred_check
          %p165 = pneg %p79
        $region18: #{tpu_custom_call.1} parent=11 // pred_check_branch
          %167 = sbr.rel (%p165) target = $region20
        $region19: #{tpu_custom_call.1} parent=11 // pred_region
          _
        $region20: #{tpu_custom_call.1} parent=11 // pred_fallthru
          _
        // Predicated region
        $region21: #{tpu_custom_call.1} parent=11 // pred_check
          %p168 = pneg %p100
        $region22: #{tpu_custom_call.1} parent=11 // pred_check_branch
          %170 = sbr.rel (%p168) target = $region24
        $region23: #{tpu_custom_call.1} parent=11 // pred_region
          _
        $region24: #{tpu_custom_call.1} parent=11 // pred_fallthru
          _
        // Predicated region
        $region25: #{tpu_custom_call.1} parent=11 // pred_check
          %p171 = pneg %p121
        $region26: #{tpu_custom_call.1} parent=11 // pred_check_branch
          %173 = sbr.rel (%p171) target = $region28
        $region27: #{tpu_custom_call.1} parent=11 // pred_region
          _
        $region28: #{tpu_custom_call.1} parent=11 // pred_fallthru
          _
      $region12: #{tpu_custom_call.1} parent=5 // pred_fallthru
        _
      %p174 = scmp.lt.s32.totalorder %s11, 3
      // Predicated region
      $region29: #{tpu_custom_call.1} parent=5 // pred_check
        %p175 = pneg %p174
      $region30: #{tpu_custom_call.1} parent=5 // pred_check_branch
        %177 = sbr.rel (%p175) target = $region32
      $region31: #{tpu_custom_call.1} parent=5 // pred_region
        // Predicated region
        $region33: #{tpu_custom_call.1} parent=31 // pred_check
          %p178 = pneg %p31
        $region34: #{tpu_custom_call.1} parent=31 // pred_check_branch
          %180 = sbr.rel (%p178) target = $region36
        $region35: #{tpu_custom_call.1} parent=31 // pred_region
          %s181 = smul.u32 2, %s11
          %s182 = ssub.s32 5, %s181
          %p183 = scmp.lt.s32.totalorder %s182, 2
          %s184 = scalar_select %p183, %s182, 2
          %s185 = smul.u32 128, %s184
          %p186 = scmp.lt.s32.totalorder %s181, 4
          %s187 = scalar_select %p186, %s181, 4
          %s188 = smul.addr %s187, 8
          %s189 = scalar_lea.vmem %s0, %s188
          %s190 = smul.u32 2, %s11
          %s191 = ssub.s32 5, %s190
          %p192 = scmp.lt.s32.totalorder %s191, 2
          %s193 = scalar_select %p192, %s191, 2
          %s194 = smul.u32 128, %s193
        $region36: #{tpu_custom_call.1} parent=31 // pred_fallthru
          _
      $region32: #{tpu_custom_call.1} parent=5 // pred_fallthru
        _
      %p195 = scmp.le.s32.totalorder 1, %s11
      %p196 = scmp.lt.s32.totalorder %s11, 4
      %p197 = pnand %p195, %p196
      %p198 = pneg %p197
      // Predicated region
      $region37: #{tpu_custom_call.1} parent=5 // pred_check
        _
      $region38: #{tpu_custom_call.1} parent=5 // pred_check_branch
        %200 = sbr.rel (%p197) target = $region40
      $region39: #{tpu_custom_call.1} parent=5 // pred_region
        %s201 = ssub.s32 %s11, 1
        %s202 = smul.u32 2, %s16
        %s203 = ssub.s32 5, %s202
        %p204 = scmp.lt.s32.totalorder %s203, 2
        %s205 = scalar_select %p204, %s203, 2
        %s206 = smul.u32 128, %s205
        %p207 = scmp.lt.s32.totalorder %s202, 4
        %s208 = scalar_select %p207, %s202, 4
        %s209 = smul.addr %s208, 8
        %s210 = scalar_lea.vmem %s0, %s209
        %p211 = pneg %p37
        %p212 = pneg %p34
        %p213 = pneg %p58
        %p214 = pneg %p55
        %p215 = pneg %p79
        %p216 = pneg %p76
        %p217 = pneg %p100
        %p218 = pneg %p97
        %p219 = pneg %p121
        %p220 = pneg %p118
        %p221 = pneg %p147
        %p222 = pneg %p144
        %s223 = sand.u32 %s134, 1
        %s224 = sand.u32 %s134, 1
        %s225 = smul.addr %s224, 16
        %s226 = scalar_lea.vmem [#allocation2], %s225
        %s227 = smul.u32 2, %s16
        %s228 = ssub.s32 5, %s227
        %p229 = scmp.lt.s32.totalorder %s228, 2
        %s230 = scalar_select %p229, %s228, 2
        %s231 = smul.u32 128, %s230
        %p232 = scmp.lt.s32.totalorder %s227, 4
        %s233 = scalar_select %p232, %s227, 4
        %s234 = smul.addr %s233, 8
        %s235 = scalar_lea.vmem %s0, %s234
        %s236 = smul.u32 2, %s16
        %s237 = ssub.s32 5, %s236
        %p238 = scmp.lt.s32.totalorder %s237, 2
        %s239 = scalar_select %p238, %s237, 2
        %s240 = smul.u32 128, %s239
        %s241 = smul.u32 2, %s16
        %s242 = ssub.s32 5, %s241
        %p243 = scmp.lt.s32.totalorder %s242, 2
        %s244 = scalar_select %p243, %s242, 2
        %s245 = smul.u32 128, %s244
        %v246 = vld [vmem:[%s235] sm:$0xff]
        %v247 = vld [vmem:[%s235 + $0x8] sm:$0xff]
        %v248 = vld [vmem:[%s1] sm:$0xf]
        %v249 = vld [vmem:[%s2] sm:$0x1]
        %v251 = vlaneseq
        %v252 = vshrl.u32 %v251, 7
        %v253 = vsub.s32 0, %v252
        %v254 = vrot.slane %v249, %v253
        %vm256 = vcmask 31744
        %v258 = vsel %vm256, %v246, 0
        %v261 = vsel %vm256, %v247, 0
        %vm263 = vcmask 1043456
        %v265 = vsel %vm263, %v248, 0
        %267 = vmatprep.subr.mxu0 0.0
        %268 = vmatpush1.msra.mxu0 %v265
        %269 = vmatprep.subr.mxu0 0.0
        %270 = vmatpush1.msra.mxu0 0.0
        %271 = vmatprep.subr.mxu0 0.0
        %272 = vmatpush1.msra.mxu0 0.0
        %273 = vmatprep.subr.mxu0 0.0
        %274 = vmatpush1.msra.mxu0 0.0
        %275 = vmatprep.subr.mxu0 0.0
        %276 = vmatpush1.msra.mxu0 0.0
        %277 = vmatprep.subr.mxu0 0.0
        %278 = vmatpush1.msra.mxu0 0.0
        %279 = vmatprep.subr.mxu0 0.0
        %280 = vmatpush1.msra.mxu0 0.0
        %281 = vmatprep.subr.mxu0 0.0
        %282 = vmatpush1.msra.mxu0 0.0
        %283 = vmatprep.subr.mxu0 0.0
        %284 = vmatpush1.msra.mxu0 0.0
        %285 = vmatprep.subr.mxu0 0.0
        %286 = vmatpush1.msra.mxu0 0.0
        %287 = vmatprep.subr.mxu0 0.0
        %288 = vmatpush1.msra.mxu0 0.0
        %289 = vmatprep.subr.mxu0 0.0
        %290 = vmatpush1.msra.mxu0 0.0
        %291 = vmatprep.subr.mxu0 0.0
        %292 = vmatpush1.msra.mxu0 0.0
        %293 = vmatprep.subr.mxu0 0.0
        %294 = vmatpush1.msra.mxu0 0.0
        %295 = vmatprep.subr.mxu0 0.0
        %296 = vmatpush1.msra.mxu0 0.0
        %297 = vmatprep.subr.mxu0 0.0
        %298 = vmatpush1.msra.mxu0 0.0
        %299 = vmatprep.subr.mxu0 0.0
        %300 = vmatpush1.msra.mxu0 0.0
        %301 = vmatprep.subr.mxu0 0.0
        %302 = vmatpush1.msra.mxu0 0.0
        %303 = vmatprep.subr.mxu0 0.0
        %304 = vmatpush1.msra.mxu0 0.0
        %305 = vmatprep.subr.mxu0 0.0
        %306 = vmatpush1.msra.mxu0 0.0
        %307 = vmatprep.subr.mxu0 0.0
        %308 = vmatpush1.msra.mxu0 0.0
        %309 = vmatprep.subr.mxu0 0.0
        %310 = vmatpush1.msra.mxu0 0.0
        %311 = vmatprep.subr.mxu0 0.0
        %312 = vmatpush1.msra.mxu0 0.0
        %313 = vmatprep.subr.mxu0 0.0
        %314 = vmatpush1.msra.mxu0 0.0
        %315 = vmatprep.subr.mxu0 0.0
        %316 = vmatpush1.msra.mxu0 0.0
        %317 = vmatprep.subr.mxu0 0.0
        %318 = vmatpush1.msra.mxu0 0.0
        %319 = vmatprep.subr.mxu0 0.0
        %320 = vmatpush1.msra.mxu0 0.0
        %321 = vmatprep.subr.mxu0 0.0
        %322 = vmatpush1.msra.mxu0 0.0
        %323 = vmatprep.subr.mxu0 0.0
        %324 = vmatpush1.msra.mxu0 0.0
        %325 = vmatprep.subr.mxu0 0.0
        %326 = vmatpush1.msra.mxu0 0.0
        %327 = vmatprep.subr.mxu0 0.0
        %328 = vmatpush1.msra.mxu0 0.0
        %329 = vmatprep.subr.mxu0 0.0
        %330 = vmatpush1.msra.mxu0 0.0
        %331 = vmatprep.mubr.f32.mxu0 0.0
        %332 = vmatmul.mubr.f32.gmra.mrb[0].mxu0 %v258
        %v333 = vpop.f32.mrb[0].mxu0
        %v334 = vadd.f32 %v254, %v333
        %v335 = vpop.f32.mrb[0].mxu0
        %336 = vmatprep.mubr.f32.mxu0 0.0
        %337 = vmatmul.mubr.f32.gmra.mrb[0].mxu0 %v261
        %v338 = vpop.f32.mrb[0].mxu0
        %v339 = vadd.f32 %v254, %v338
        %v340 = vpop.f32.mrb[0].mxu0
        %341 = vdwg.mxu0
        %v342 = vmax.f32 %v334, 0.0
        %v343 = vmax.f32 %v339, 0.0
        %v344 = vld [vmem:[%s3] sm:$0xff]
        %v345 = vld [vmem:[%s3 + $0x8] sm:$0x3]
        %v346 = vld [vmem:[%s4] sm:$0x1]
        %v348 = vlaneseq
        %v349 = vshrl.u32 %v348, 7
        %v350 = vsub.s32 0, %v349
        %v351 = vrot.slane %v346, %v350
        %vm353 = vcmask 80896
        %v355 = vsel %vm353, %v342, 0
        %v358 = vsel %vm353, %v343, 0
        %vm360 = vcmask 1041408
        %v362 = vsel %vm360, %v345, 0
        %364 = vmatprep.subr.mxu0 0.0
        %365 = vmatpush1.msra.mxu0 %v344
        %366 = vmatprep.subr.mxu0 0.0
        %367 = vmatpush1.msra.mxu0 %v362
        %368 = vmatprep.subr.mxu0 0.0
        %369 = vmatpush1.msra.mxu0 0.0
        %370 = vmatprep.subr.mxu0 0.0
        %371 = vmatpush1.msra.mxu0 0.0
        %372 = vmatprep.subr.mxu0 0.0
        %373 = vmatpush1.msra.mxu0 0.0
        %374 = vmatprep.subr.mxu0 0.0
        %375 = vmatpush1.msra.mxu0 0.0
        %376 = vmatprep.subr.mxu0 0.0
        %377 = vmatpush1.msra.mxu0 0.0
        %378 = vmatprep.subr.mxu0 0.0
        %379 = vmatpush1.msra.mxu0 0.0
        %380 = vmatprep.subr.mxu0 0.0
        %381 = vmatpush1.msra.mxu0 0.0
        %382 = vmatprep.subr.mxu0 0.0
        %383 = vmatpush1.msra.mxu0 0.0
        %384 = vmatprep.subr.mxu0 0.0
        %385 = vmatpush1.msra.mxu0 0.0
        %386 = vmatprep.subr.mxu0 0.0
        %387 = vmatpush1.msra.mxu0 0.0
        %388 = vmatprep.subr.mxu0 0.0
        %389 = vmatpush1.msra.mxu0 0.0
        %390 = vmatprep.subr.mxu0 0.0
        %391 = vmatpush1.msra.mxu0 0.0
        %392 = vmatprep.subr.mxu0 0.0
        %393 = vmatpush1.msra.mxu0 0.0
        %394 = vmatprep.subr.mxu0 0.0
        %395 = vmatpush1.msra.mxu0 0.0
        %396 = vmatprep.subr.mxu0 0.0
        %397 = vmatpush1.msra.mxu0 0.0
        %398 = vmatprep.subr.mxu0 0.0
        %399 = vmatpush1.msra.mxu0 0.0
        %400 = vmatprep.subr.mxu0 0.0
        %401 = vmatpush1.msra.mxu0 0.0
        %402 = vmatprep.subr.mxu0 0.0
        %403 = vmatpush1.msra.mxu0 0.0
        %404 = vmatprep.subr.mxu0 0.0
        %405 = vmatpush1.msra.mxu0 0.0
        %406 = vmatprep.subr.mxu0 0.0
        %407 = vmatpush1.msra.mxu0 0.0
        %408 = vmatprep.subr.mxu0 0.0
        %409 = vmatpush1.msra.mxu0 0.0
        %410 = vmatprep.subr.mxu0 0.0
        %411 = vmatpush1.msra.mxu0 0.0
        %412 = vmatprep.subr.mxu0 0.0
        %413 = vmatpush1.msra.mxu0 0.0
        %414 = vmatprep.subr.mxu0 0.0
        %415 = vmatpush1.msra.mxu0 0.0
        %416 = vmatprep.subr.mxu0 0.0
        %417 = vmatpush1.msra.mxu0 0.0
        %418 = vmatprep.subr.mxu0 0.0
        %419 = vmatpush1.msra.mxu0 0.0
        %420 = vmatprep.subr.mxu0 0.0
        %421 = vmatpush1.msra.mxu0 0.0
        %422 = vmatprep.subr.mxu0 0.0
        %423 = vmatpush1.msra.mxu0 0.0
        %424 = vmatprep.subr.mxu0 0.0
        %425 = vmatpush1.msra.mxu0 0.0
        %426 = vmatprep.subr.mxu0 0.0
        %427 = vmatpush1.msra.mxu0 0.0
        %428 = vmatprep.mubr.f32.mxu0 0.0
        %429 = vmatmul.mubr.f32.gmra.mrb[0].mxu0 %v355
        %v430 = vpop.f32.mrb[0].mxu0
        %v431 = vadd.f32 %v351, %v430
        %v432 = vpop.f32.mrb[0].mxu0
        %433 = vmatprep.mubr.f32.mxu0 0.0
        %434 = vmatmul.mubr.f32.gmra.mrb[0].mxu0 %v358
        %v435 = vpop.f32.mrb[0].mxu0
        %v436 = vadd.f32 %v351, %v435
        %v437 = vpop.f32.mrb[0].mxu0
        %438 = vdwg.mxu0
        %vm439 = vcmask 23552
        %440 = vst.msk [vmem:[%s226] sm:$0xff] %vm439, %v431
        %441 = vst.msk [vmem:[%s226 + $0x8] sm:$0xff] %vm439, %v436
        %s442 = sand.u32 %s134, 1
        %s443 = sand.u32 %s134, 1
        %s444 = smul.addr %s443, 16
        %s445 = scalar_lea.vmem [#allocation2], %s444
        // Predicated region
        $region41: #{tpu_custom_call.1} parent=39 // pred_check
          %p446 = pneg %p144
        $region42: #{tpu_custom_call.1} parent=39 // pred_check_branch
          %448 = sbr.rel (%p446) target = $region44
        $region43: #{tpu_custom_call.1} parent=39 // pred_region
          %s449 = smul.u32 2, %s16
          %s450 = ssub.s32 5, %s449
          %p451 = scmp.lt.s32.totalorder %s450, 2
          %s452 = scalar_select %p451, %s450, 2
          %s453 = smul.u32 128, %s452
          %p454 = scmp.ne.s32.totalorder 0, %s453
          %s455 = smul.addr %s449, 8
          %s456 = scalar_lea.vmem %s5, %s455
          // Predicated region
          $region45: #{tpu_custom_call.1} parent=43 // pred_check
            %p457 = pneg %p454
          $region46: #{tpu_custom_call.1} parent=43 // pred_check_branch
            %459 = sbr.rel (%p457) target = $region48
          $region47: #{tpu_custom_call.1} parent=43 // pred_region
            // Predicated region
            $region49: #{tpu_custom_call.1} parent=47 // pred_check
              _
            $region50: #{tpu_custom_call.1} parent=47 // pred_check_branch
              %461 = sbr.rel (0) target = $region52
            $region51: #{tpu_custom_call.1} parent=47 // pred_region
              // Predicated region
              $region71: #{tpu_custom_call.1} parent=51 // pred_check
                _
              $region72: #{tpu_custom_call.1} parent=51 // pred_check_branch
                %512 = sbr.rel (0) target = $region74
              $region73: #{tpu_custom_call.1} parent=51 // pred_region
                %s513 = sshrl.u32 %s452, 1
                // While loop
                $region75: #{tpu_custom_call.1} parent=73 // loop_pre_header
                  _
                $region76: #{tpu_custom_call.1} parent=73 // loop_header
                  %s515 = sphi 0, %s517
                  %p516 = scmp.ge.s32.totalorder %s515, %s513
                  %s520 = sphi 0, %s529
                  %s521 = sphi %s445, %s532
                  %s522 = sphi %s456, %s533
                $region77: #{tpu_custom_call.1} parent=73 // loop_header_branch
                  %519 = sbr.rel (%p516) target = $region81
                $region78: #{tpu_custom_call.1} parent=73 // loop_body
                  %v523 = vld [vmem:[%s521] sm:$0xff]
                  %524 = vst [vmem:[%s522] sm:$0xff] %v523
                  %v525 = vld [vmem:[%s521 + $0x8] sm:$0xff]
                  %526 = vst [vmem:[%s522 + $0x8] sm:$0xff] %v525
                  %s527 = sadd.s32 1, %s520
                  %p528 = scmp.ge.s32.totalorder %s527, %s513
                  %s529 = scalar_select %p528, 0, %s527
                  %s530 = smul.u32 %s529, 16
                  %s531 = smul.u32 %s529, 16
                  %s532 = scalar_lea.vmem %s445, %s530 [#allocation2]
                  %s533 = scalar_lea.vmem %s456, %s531
                $region79: #{tpu_custom_call.1} parent=73 // loop_footer
                  %s517 = sadd.s32 %s515, 1
                $region80: #{tpu_custom_call.1} parent=73 // loop_footer_branch
                  %514 = sbr.rel target = $region76
                $region81: #{tpu_custom_call.1} parent=73 // loop_exit
                  _
                %s534 = sshrl.u32 %s452, 1
                %s535 = sand.u32 %s452, 1
                %s536 = smul.u32 %s534, 2
                %s537 = smul.u32 8, %s536
                %s538 = scalar_lea.vmem %s445, %s537 [#allocation2]
                %s539 = smul.u32 8, %s536
                %s540 = scalar_lea.vmem %s456, %s539
                // While loop
                $region82: #{tpu_custom_call.1} parent=73 // loop_pre_header
                  _
                $region83: #{tpu_custom_call.1} parent=73 // loop_header
                  %s542 = sphi 0, %s544
                  %p543 = scmp.ge.s32.totalorder %s542, %s535
                  %s547 = sphi 0, %s554
                  %s548 = sphi %s538, %s557
                  %s549 = sphi %s540, %s558
                $region84: #{tpu_custom_call.1} parent=73 // loop_header_branch
                  %546 = sbr.rel (%p543) target = $region88
                $region85: #{tpu_custom_call.1} parent=73 // loop_body
                  %v550 = vld [vmem:[%s548] sm:$0xff]
                  %551 = vst [vmem:[%s549] sm:$0xff] %v550
                  %s552 = sadd.s32 1, %s547
                  %p553 = scmp.ge.s32.totalorder %s552, %s535
                  %s554 = scalar_select %p553, 0, %s552
                  %s555 = smul.u32 %s554, 8
                  %s556 = smul.u32 %s554, 8
                  %s557 = scalar_lea.vmem %s538, %s555 [#allocation2]
                  %s558 = scalar_lea.vmem %s540, %s556
                $region86: #{tpu_custom_call.1} parent=73 // loop_footer
                  %s544 = sadd.s32 %s542, 1
                $region87: #{tpu_custom_call.1} parent=73 // loop_footer_branch
                  %541 = sbr.rel target = $region83
                $region88: #{tpu_custom_call.1} parent=73 // loop_exit
                  _
              $region74: #{tpu_custom_call.1} parent=51 // pred_fallthru
                _
              // Predicated region
              $region89: #{tpu_custom_call.1} parent=51 // pred_check
                _
              $region90: #{tpu_custom_call.1} parent=51 // pred_check_branch
                %560 = sbr.rel target = $region92
              $region91: #{tpu_custom_call.1} parent=51 // pred_region
                _
              $region92: #{tpu_custom_call.1} parent=51 // pred_fallthru
                _
            $region52: #{tpu_custom_call.1} parent=47 // pred_fallthru
              _
            // Predicated region
            $region53: #{tpu_custom_call.1} parent=47 // pred_check
              _
            $region54: #{tpu_custom_call.1} parent=47 // pred_check_branch
              %463 = sbr.rel target = $region56
            $region55: #{tpu_custom_call.1} parent=47 // pred_region
              %s465 = sshrl.u32 %s452, 1
              // While loop
              $region57: #{tpu_custom_call.1} parent=55 // loop_pre_header
                _
              $region58: #{tpu_custom_call.1} parent=55 // loop_header
                %s467 = sphi 0, %s469
                %p468 = scmp.ge.s32.totalorder %s467, %s465
                %s472 = sphi 0, %s481
                %s473 = sphi %s445, %s484
                %s474 = sphi %s456, %s485
              $region59: #{tpu_custom_call.1} parent=55 // loop_header_branch
                %471 = sbr.rel (%p468) target = $region63
              $region60: #{tpu_custom_call.1} parent=55 // loop_body
                %v475 = vld [vmem:[%s473] sm:$0xff]
                %476 = vst [vmem:[%s474] sm:$0xff] %v475
                %v477 = vld [vmem:[%s473 + $0x8] sm:$0xff]
                %478 = vst [vmem:[%s474 + $0x8] sm:$0xff] %v477
                %s479 = sadd.s32 1, %s472
                %p480 = scmp.ge.s32.totalorder %s479, %s465
                %s481 = scalar_select %p480, 0, %s479
                %s482 = smul.u32 %s481, 16
                %s483 = smul.u32 %s481, 16
                %s484 = scalar_lea.vmem %s445, %s482 [#allocation2]
                %s485 = scalar_lea.vmem %s456, %s483
              $region61: #{tpu_custom_call.1} parent=55 // loop_footer
                %s469 = sadd.s32 %s467, 1
              $region62: #{tpu_custom_call.1} parent=55 // loop_footer_branch
                %466 = sbr.rel target = $region58
              $region63: #{tpu_custom_call.1} parent=55 // loop_exit
                _
              %s486 = sshrl.u32 %s452, 1
              %s487 = sand.u32 %s452, 1
              %s488 = smul.u32 %s486, 2
              %s489 = smul.u32 8, %s488
              %s490 = scalar_lea.vmem %s445, %s489 [#allocation2]
              %s491 = smul.u32 8, %s488
              %s492 = scalar_lea.vmem %s456, %s491
              // While loop
              $region64: #{tpu_custom_call.1} parent=55 // loop_pre_header
                _
              $region65: #{tpu_custom_call.1} parent=55 // loop_header
                %s494 = sphi 0, %s496
                %p495 = scmp.ge.s32.totalorder %s494, %s487
                %s499 = sphi 0, %s506
                %s500 = sphi %s490, %s509
                %s501 = sphi %s492, %s510
              $region66: #{tpu_custom_call.1} parent=55 // loop_header_branch
                %498 = sbr.rel (%p495) target = $region70
              $region67: #{tpu_custom_call.1} parent=55 // loop_body
                %v502 = vld [vmem:[%s500] sm:$0xff]
                %503 = vst [vmem:[%s501] sm:$0xff] %v502
                %s504 = sadd.s32 1, %s499
                %p505 = scmp.ge.s32.totalorder %s504, %s487
                %s506 = scalar_select %p505, 0, %s504
                %s507 = smul.u32 %s506, 8
                %s508 = smul.u32 %s506, 8
                %s509 = scalar_lea.vmem %s490, %s507 [#allocation2]
                %s510 = scalar_lea.vmem %s492, %s508
              $region68: #{tpu_custom_call.1} parent=55 // loop_footer
                %s496 = sadd.s32 %s494, 1
              $region69: #{tpu_custom_call.1} parent=55 // loop_footer_branch
                %493 = sbr.rel target = $region65
              $region70: #{tpu_custom_call.1} parent=55 // loop_exit
                _
            $region56: #{tpu_custom_call.1} parent=47 // pred_fallthru
              _
          $region48: #{tpu_custom_call.1} parent=43 // pred_fallthru
            _
          %561 = vnop
        $region44: #{tpu_custom_call.1} parent=39 // pred_fallthru
          _
      $region40: #{tpu_custom_call.1} parent=5 // pred_fallthru
        _
      %p562 = scmp.le.s32.totalorder 2, %s11
      // Predicated region
      $region93: #{tpu_custom_call.1} parent=5 // pred_check
        %p563 = pneg %p562
      $region94: #{tpu_custom_call.1} parent=5 // pred_check_branch
        %565 = sbr.rel (%p563) target = $region96
      $region95: #{tpu_custom_call.1} parent=5 // pred_region
        %s566 = ssub.s32 %s11, 2
        // Predicated region
        $region97: #{tpu_custom_call.1} parent=95 // pred_check
          %p567 = pneg %p150
        $region98: #{tpu_custom_call.1} parent=95 // pred_check_branch
          %569 = sbr.rel (%p567) target = $region100
        $region99: #{tpu_custom_call.1} parent=95 // pred_region
          %s570 = sand.u32 %s135, 1
          %s571 = sand.u32 %s135, 1
          %s572 = smul.addr %s571, 16
          %s573 = scalar_lea.vmem [#allocation2], %s572
        $region100: #{tpu_custom_call.1} parent=95 // pred_fallthru
          _
      $region96: #{tpu_custom_call.1} parent=5 // pred_fallthru
        _
    $region6: #{tpu_custom_call.1} parent=1 // loop_footer
      %s15 = sadd.s32 1, %s11
    $region7: #{tpu_custom_call.1} parent=1 // loop_footer_branch
      %10 = sbr.rel target = $region3
    $region8: #{tpu_custom_call.1} parent=1 // loop_exit
      _

</llo_original>
